<compile_context>
chip_gen: v5e
topology: v5e:2x2
jax: 0.10.0
libtpu: 0.0.40
codegen_flags: <defaults>
</compile_context>

<pallas_src>
import functools
import math

import numpy as np
import jax
import jax.numpy as jnp
from jax.experimental import pallas as pl
from jax.experimental.pallas import tpu as pltpu

_LANE = 128
_SUBLANE = 8
# Below this the second (double-buffer) copy of the constant weight is noise.
_WEIGHT_SINGLE_BUFFER_MIN_BYTES = 1 << 20


def _round_up(n, m):
    return ((n + m - 1) // m) * m


def _vmem_capacity_bytes():
    """Physical VMEM of the local TensorCore (falls back to v7x's 64 MiB)."""
    try:
        cap = int(pltpu.get_tpu_info().vmem_capacity_bytes)
        if cap > 0:
            return cap
    except Exception:
        pass
    return 64 << 20


# ----------------------------------------------------------------------------
# Cached real-DFT matrices (ortho norm), exact width (no lane padding).
# ----------------------------------------------------------------------------
@functools.lru_cache(maxsize=None)
def _rfft_weight(t, dtype_name):
    """(2, T, K): plane 0 = cos/sqrt(T), plane 1 = -sin/sqrt(T)."""
    k = t // 2 + 1
    tt = np.arange(t, dtype=np.float64)[:, None]
    kk = np.arange(k, dtype=np.float64)[None, :]
    ang = 2.0 * np.pi * ((tt * kk) % t) / t          # mod-T reduction: f64-exact
    s = 1.0 / math.sqrt(t)
    w = np.empty((2, t, k), dtype=np.float32)
    w[0] = np.cos(ang) * s
    w[1] = -np.sin(ang) * s
    return jnp.asarray(w, dtype=jnp.dtype(dtype_name))


@functools.lru_cache(maxsize=None)
def _irfft_weight(k, dtype_name):
    """(2, K, T): plane 0 applied to real bins, plane 1 to imag bins."""
    # torch.fft.irfft default output length: T = 2 * (K - 1) (even original T).
    t = 2 * (k - 1)
    kk = np.arange(k, dtype=np.float64)[:, None]
    nn = np.arange(t, dtype=np.float64)[None, :]
    ang = 2.0 * np.pi * ((kk * nn) % t) / t
    wk = np.where((kk == 0) | (kk == t // 2), 1.0, 2.0)   # DC/Nyquist once, rest twice
    s = 1.0 / math.sqrt(t)
    w = np.empty((2, k, t), dtype=np.float32)
    w[0] = wk * np.cos(ang) * s
    w[1] = -wk * np.sin(ang) * s
    return jnp.asarray(w, dtype=jnp.dtype(dtype_name))


# ----------------------------------------------------------------------------
# Pallas kernels
# ----------------------------------------------------------------------------
def _rfft_kernel(x_ref, w_ref, out_ref):
    # x_ref: (1, tm, T); w_ref: (2, T, tn); out_ref: (1, 2, tm, tn)
    x = x_ref[0]
    w_re = w_ref[0]
    w_im = w_ref[1]
    if x.dtype != w_re.dtype:            # bf16-weight path: cast activations once
        x = x.astype(w_re.dtype)
    # One MXU dot per plane, written straight into its output plane:
    # no (tm, 2*K) intermediate and no extra VMEM->VMEM copy.
    out_ref[0, 0, :, :] = jnp.dot(x, w_re, preferred_element_type=jnp.float32)
    out_ref[0, 1, :, :] = jnp.dot(x, w_im, preferred_element_type=jnp.float32)


def _irfft_kernel(x_ref, w_ref, out_ref):
    # x_ref: (1, 2, tm, K); w_ref: (2, K, tn); out_ref: (1, tm, tn)
    xr = x_ref[0, 0]
    xi = x_ref[0, 1]
    w_re = w_ref[0]
    w_im = w_ref[1]
    if xr.dtype != w_re.dtype:
        xr = xr.astype(w_re.dtype)
        xi = xi.astype(w_re.dtype)
    # TODO(synk): single dot_general contracting over (plane, K) once Mosaic
    # supports multiple contracting dims; until then two dots + one VPU add.
    acc = jnp.dot(xr, w_re, preferred_element_type=jnp.float32)
    acc = acc + jnp.dot(xi, w_im, preferred_element_type=jnp.float32)
    out_ref[0, :, :] = acc


# ----------------------------------------------------------------------------
# Tiling / VMEM planner (generation-aware)
# ----------------------------------------------------------------------------
def _plan(*, b, rows, in_elems_per_row, out_planes, contract, out_cols,
          requested_tm, w_elem_bytes):
    """Returns (tm, tn, col_tiles, single_buffer_weight, vmem_limit_bytes)."""
    cap = _vmem_capacity_bytes()
    budget = (cap * 7) // 10                       # leave Mosaic scratch headroom

    w_full = 2 * contract * out_cols * w_elem_bytes
    if w_full <= budget // 2:
        # Full weight resident; single-buffer it when the second copy matters.
        tn, col_tiles = out_cols, 1
        single_buffer = w_full >= _WEIGHT_SINGLE_BUFFER_MIN_BYTES
        w_resident = w_full * (1 if single_buffer else 2)
    else:
        # Weight too big (e.g. T >= ~4096 on v7x): column-tile it so only a
        # (2, contract, tn) slab is resident (double-buffered, it changes per
        # column-grid step).
        slab_budget = max(budget // 3, 4 << 20)
        tn = max(_LANE,
                 (slab_budget // (4 * contract * w_elem_bytes)) // _LANE * _LANE)
        if tn >= out_cols:
            tn, col_tiles, single_buffer = out_cols, 1, True
        else:
            col_tiles, single_buffer = pl.cdiv(out_cols, tn), False
        w_resident = 2 * contract * tn * w_elem_bytes * (1 if single_buffer else 2)

    slack = 2 << 20
    avail = max(budget - w_resident - slack, 1 << 20)
    # Double-buffered f32 input tile + double-buffered f32 output tile, per row.
    per_row_bytes = 2 * in_elems_per_row * 4 + 2 * out_planes * tn * 4
    tm = min(requested_tm, max(_SUBLANE, avail // per_row_bytes))

    # Megacore / 2-TC (v7x): keep >= ~4 parallel grid points when rows allow.
    want_row_tiles = -(-4 // (b * col_tiles))      # ceil(4 / (b * col_tiles))
    if want_row_tiles > 1:
        tm = min(tm, max(_SUBLANE,
                         _round_up(-(-rows // want_row_tiles), _SUBLANE)))

    if tm >= rows:
        tm = rows                                  # full dim: always layout-legal
    else:
        tm = max(_SUBLANE, (tm // _SUBLANE) * _SUBLANE)

    footprint = w_resident + tm * per_row_bytes
    vmem_limit = int(max(32 << 20, min((cap * 9) // 10, footprint + (8 << 20))))
    return tm, tn, col_tiles, single_buffer, vmem_limit


def _weight_spec(block_shape, index_map, single_buffer):
    if single_buffer and hasattr(pl, "Buffered"):
        try:
            return pl.BlockSpec(block_shape, index_map,
                                pipeline_mode=pl.Buffered(1))
        except TypeError:       # older API without pipeline_mode: fall back
            pass
    return pl.BlockSpec(block_shape, index_map)


# ----------------------------------------------------------------------------
# pallas_call wrappers
# ----------------------------------------------------------------------------
def _rfft_call(x3, tm, weight_dtype):
    # x3: (B, rows, T)  ->  (B, 2, rows, K)  (plane 0 = real, 1 = imag)
    b, rows, t = x3.shape
    k = t // 2 + 1
    w = _rfft_weight(t, weight_dtype)                       # (2, T, K)
    w_elem = jnp.dtype(weight_dtype).itemsize
    tm_eff, tn, col_tiles, single_buf, vmem_limit = _plan(
        b=b, rows=rows, in_elems_per_row=t, out_planes=2,
        contract=t, out_cols=k, requested_tm=tm, w_elem_bytes=w_elem)
    grid = (b, pl.cdiv(rows, tm_eff), col_tiles)
    cost = pl.CostEstimate(
        flops=2 * b * rows * t * 2 * k,
        transcendentals=0,
        bytes_accessed=4 * (b * rows * t + b * 2 * rows * k) + w_elem * 2 * t * k,
    )
    return pl.pallas_call(
        _rfft_kernel,
        out_shape=jax.ShapeDtypeStruct((b, 2, rows, k), jnp.float32),
        grid_spec=pltpu.PrefetchScalarGridSpec(
            num_scalar_prefetch=0,
            grid=grid,
            in_specs=[
                pl.BlockSpec((1, tm_eff, t), lambda bi, ri, ki: (bi, ri, 0)),
                _weight_spec((2, t, tn), lambda bi, ri, ki: (0, 0, ki), single_buf),
            ],
            out_specs=pl.BlockSpec((1, 2, tm_eff, tn),
                                   lambda bi, ri, ki: (bi, 0, ri, ki)),
        ),
        compiler_params=pltpu.CompilerParams(
            dimension_semantics=("parallel", "parallel", "parallel"),
            vmem_limit_bytes=vmem_limit,
        ),
        cost_estimate=cost,
    )(x3, w)


def _irfft_call(x4, tm, weight_dtype):
    # x4: (B, 2, rows, K) with [real, imag] stacked on axis 1 -> (B, rows, T)
    b, _, rows, k = x4.shape
    t = 2 * (k - 1)
    w = _irfft_weight(k, weight_dtype)                      # (2, K, T)
    w_elem = jnp.dtype(weight_dtype).itemsize
    tm_eff, tn, col_tiles, single_buf, vmem_limit = _plan(
        b=b, rows=rows, in_elems_per_row=2 * k, out_planes=1,
        contract=k, out_cols=t, requested_tm=tm, w_elem_bytes=w_elem)
    grid = (b, pl.cdiv(rows, tm_eff), col_tiles)
    cost = pl.CostEstimate(
        flops=2 * b * rows * 2 * k * t,
        transcendentals=0,
        bytes_accessed=4 * (2 * b * rows * k + b * rows * t) + w_elem * 2 * k * t,
    )
    return pl.pallas_call(
        _irfft_kernel,
        out_shape=jax.ShapeDtypeStruct((b, rows, t), jnp.float32),
        grid_spec=pltpu.PrefetchScalarGridSpec(
            num_scalar_prefetch=0,
            grid=grid,
            in_specs=[
                pl.BlockSpec((1, 2, tm_eff, k), lambda bi, ri, ki: (bi, 0, ri, 0)),
                _weight_spec((2, k, tn), lambda bi, ri, ki: (0, 0, ki), single_buf),
            ],
            out_specs=pl.BlockSpec((1, tm_eff, tn),
                                   lambda bi, ri, ki: (bi, ri, ki)),
        ),
        compiler_params=pltpu.CompilerParams(
            dimension_semantics=("parallel", "parallel", "parallel"),
            vmem_limit_bytes=vmem_limit,
        ),
        cost_estimate=cost,
    )(x4, w)


# ----------------------------------------------------------------------------
# FeatureConversion forward (mirrors the PyTorch module)
# ----------------------------------------------------------------------------
@functools.partial(jax.jit,
                   static_argnames=("channels", "inverse", "tm", "weight_dtype"))
def feature_conversion(x, *, channels, inverse, tm=512, weight_dtype="float32"):
    """inverse=False: [B, C, Fr, T]   -> [B, 2C, Fr, T//2 + 1]
       inverse=True : [B, 2C', Fr, K] -> [B, C', Fr, 2*(K-1)]   (channels == 2C')

    weight_dtype="bfloat16" trades ~2-4x MXU throughput (v6e/v7x) for DFT
    coefficient rounding; default f32 matches the reference within 1e-4.
    """
    x = x.astype(jnp.float32)            # matches torch `.float()` in the reference
    if inverse:
        b, c2, fr, k = x.shape
        half = channels // 2
        assert c2 == 2 * half, "inverse FeatureConversion expects channel count == channels"
        assert k >= 2, "irfft needs at least 2 frequency bins"
        # NOTE: output length is torch's default n = 2*(K-1) (even original T);
        # odd-length originals would need the true length plumbed through.
        xs = x.reshape(b, 2, half * fr, k)           # channel halves -> plane axis (free)
        out = _irfft_call(xs, tm, weight_dtype)      # (B, half*Fr, T) exact width
        t = 2 * (k - 1)
        return out.reshape(b, half, fr, t)           # free reshape
    else:
        b, c, fr, t = x.shape
        xs = x.reshape(b, c * fr, t)                 # free reshape
        out = _rfft_call(xs, tm, weight_dtype)       # (B, 2, C*Fr, K) exact width
        k = t // 2 + 1
        # (B, 2, C*Fr, K) -> (B, 2C, Fr, K) is a free reshape == torch.cat(dim=1).
        return out.reshape(b, 2 * c, fr, k)


if __name__ == "__main__":
    key = jax.random.PRNGKey(0)
    B, C, Fr, T = 2, 4, 16, 16

    x = jax.random.normal(key, (B, C, Fr, T), dtype=jnp.float32)

    # Forward (RFFT) layer — FeatureConversion(channels=2*C, inverse=False)
    y = feature_conversion(x, channels=2 * C, inverse=False)
    y = jax.block_until_ready(y)
    assert y.shape == (B, 2 * C, Fr, T // 2 + 1), y.shape

    # Reference check against jnp.fft
    ref_c = jnp.fft.rfft(x, axis=3, norm="ortho")
    ref = jnp.concatenate([ref_c.real, ref_c.imag], axis=1)
    assert jnp.allclose(y, ref, atol=1e-4, rtol=1e-4), float(jnp.max(jnp.abs(y - ref)))

    # Inverse (IRFFT) layer — FeatureConversion(channels=2*C, inverse=True)
    z = feature_conversion(y, channels=2 * C, inverse=True)
    z = jax.block_until_ready(z)
    assert z.shape == (B, C, Fr, T), z.shape
    assert jnp.allclose(z, x, atol=1e-4, rtol=1e-4), float(jnp.max(jnp.abs(z - x)))

    print("KERNEL_OK")
</pallas_src>

<mosaic_0001>
module attributes {stable_mosaic.version = 11 : i64} {
  func.func @_rfft_kernel(%arg0: i32, %arg1: i32, %arg2: i32, %arg3: memref<1x32x16xf32, #tpu.memory_space<vmem>>, %arg4: memref<2x16x9xf32, #tpu.memory_space<vmem>>, %arg5: memref<1x2x32x9xf32, #tpu.memory_space<vmem>>) attributes {dimension_semantics = [#tpu.dimension_semantics<parallel>, #tpu.dimension_semantics<parallel>, #tpu.dimension_semantics<parallel>], iteration_bounds = array<i64: 2, 2, 1>, scalar_prefetch = 0 : i64, scratch_operands = 0 : i64, tpu.core_type = #tpu.core_type<tc>, window_params = [{transform_indices = @transform_0, window_bounds = array<i64: 1, 32, 16>}, {transform_indices = @transform_1, window_bounds = array<i64: 2, 16, 9>}, {transform_indices = @transform_2, window_bounds = array<i64: 1, 2, 32, 9>}]} {
    %c0 = arith.constant 0 : index
    %c0_0 = arith.constant 0 : index
    %c0_1 = arith.constant 0 : index
    %0 = vector.load %arg3[%c0, %c0_0, %c0_1] : memref<1x32x16xf32, #tpu.memory_space<vmem>>, vector<1x32x16xf32>
    %1 = vector.shape_cast %0 : vector<1x32x16xf32> to vector<32x16xf32>
    %c0_2 = arith.constant 0 : index
    %c0_3 = arith.constant 0 : index
    %c0_4 = arith.constant 0 : index
    %2 = vector.load %arg4[%c0_2, %c0_3, %c0_4] : memref<2x16x9xf32, #tpu.memory_space<vmem>>, vector<1x16x9xf32>
    %3 = vector.shape_cast %2 : vector<1x16x9xf32> to vector<16x9xf32>
    %c1 = arith.constant 1 : index
    %c0_5 = arith.constant 0 : index
    %c0_6 = arith.constant 0 : index
    %4 = vector.load %arg4[%c1, %c0_5, %c0_6] : memref<2x16x9xf32, #tpu.memory_space<vmem>>, vector<1x16x9xf32>
    %5 = vector.shape_cast %4 : vector<1x16x9xf32> to vector<16x9xf32>
    %cst = arith.constant dense<0.000000e+00> : vector<32x9xf32>
    %6 = tpu.matmul %1, %3, %cst {dimension_numbers = #tpu.dot_dimension_numbers<[1], [0], [0], [1], [0, 0, 1, 1], [], []>} : vector<32x16xf32>, vector<16x9xf32>, vector<32x9xf32> -> vector<32x9xf32>
    %c0_7 = arith.constant 0 : index
    %c0_8 = arith.constant 0 : index
    %c0_9 = arith.constant 0 : index
    %c0_10 = arith.constant 0 : index
    %7 = vector.load %arg5[%c0_7, %c0_8, %c0_9, %c0_10] : memref<1x2x32x9xf32, #tpu.memory_space<vmem>>, vector<1x1x32x9xf32>
    %8 = vector.shape_cast %7 : vector<1x1x32x9xf32> to vector<32x9xf32>
    %9 = vector.shape_cast %6 : vector<32x9xf32> to vector<1x1x32x9xf32>
    tpu.vector_store %arg5[%c0_7, %c0_8, %c0_9, %c0_10], %9 {strides = array<i32>} : memref<1x2x32x9xf32, #tpu.memory_space<vmem>>, vector<1x1x32x9xf32>,
    %cst_11 = arith.constant dense<0.000000e+00> : vector<32x9xf32>
    %10 = tpu.matmul %1, %5, %cst_11 {dimension_numbers = #tpu.dot_dimension_numbers<[1], [0], [0], [1], [0, 0, 1, 1], [], []>} : vector<32x16xf32>, vector<16x9xf32>, vector<32x9xf32> -> vector<32x9xf32>
    %c0_12 = arith.constant 0 : index
    %c1_13 = arith.constant 1 : index
    %c0_14 = arith.constant 0 : index
    %c0_15 = arith.constant 0 : index
    %11 = vector.load %arg5[%c0_12, %c1_13, %c0_14, %c0_15] : memref<1x2x32x9xf32, #tpu.memory_space<vmem>>, vector<1x1x32x9xf32>
    %12 = vector.shape_cast %11 : vector<1x1x32x9xf32> to vector<32x9xf32>
    %13 = vector.shape_cast %10 : vector<32x9xf32> to vector<1x1x32x9xf32>
    tpu.vector_store %arg5[%c0_12, %c1_13, %c0_14, %c0_15], %13 {strides = array<i32>} : memref<1x2x32x9xf32, #tpu.memory_space<vmem>>, vector<1x1x32x9xf32>,
    return
  }
  func.func @transform_0(%arg0: i32, %arg1: i32, %arg2: i32) -> (i32, i32, i32) {
    %c0_i32 = arith.constant 0 : i32
    %c0_i32_0 = arith.constant 0 : i32
    return %arg0, %arg1, %c0_i32 : i32, i32, i32
  }
  func.func @transform_1(%arg0: i32, %arg1: i32, %arg2: i32) -> (i32, i32, i32) {
    %c0_i32 = arith.constant 0 : i32
    %c0_i32_0 = arith.constant 0 : i32
    %c0_i32_1 = arith.constant 0 : i32
    return %c0_i32, %c0_i32_0, %arg2 : i32, i32, i32
  }
  func.func @transform_2(%arg0: i32, %arg1: i32, %arg2: i32) -> (i32, i32, i32, i32) {
    %c0_i32 = arith.constant 0 : i32
    %c0_i32_0 = arith.constant 0 : i32
    return %arg0, %c0_i32, %arg1, %arg2 : i32, i32, i32, i32
  }
}

</mosaic_0001>

<llo_original>
// kernel: feature_conversion.1
$region0: #{feature_conversion.1}
  #allocation0 [shape = 'u32[]', space=smem, size = 0x4, offset = 0x4, fixed_abs, tag = 'smem constant byte address 0x4 - core index']
  #allocation1 [shape = 'u32[72,128]{1,0:T(1,128)}', space=vmem, size = 0x9000, scoped, tag = 'internal scratch']
  %s0 = inlined_call_operand.hbm [shape: f32[2,64,16], index: 0, kind: input, shape index: {}]
  %s1 = inlined_call_operand.hbm [shape: f32[2,16,9], index: 1, kind: input, shape index: {}]
  %s2 = inlined_call_operand.vmem [shape: f32[2,2,64,9], index: 2, kind: output, shape index: {}]
  %s3 = sld [smem:[#allocation0]]
  $region83: #{feature_conversion.1} parent=0
    _
  %s5 = ssub.s32 1, %s3
  %s6 = scalar_select 0, %s5, %s3
  $region1: #{feature_conversion.1} parent=0
    #allocation2 [shape = 'u8[32768]{0}', space=vmem, size = 0x8000, scoped, tag = 'input window, operand 0']
    #allocation3 [shape = 's32[2]{0}', space=sflag, size = 0x8, scoped, tag = 'scoped memory for feature_conversion.1']
    #allocation4 [shape = 'u8[16384]{0}', space=vmem, size = 0x4000, scoped, tag = 'input window, operand 1, single buffered']
    #allocation5 [shape = 's32[1]{0}', space=sflag, size = 0x4, scoped, tag = 'scoped memory for feature_conversion.1']
    #allocation6 [shape = 'u8[65536]{0}', space=vmem, size = 0x10000, scoped, tag = 'output window, operand 0']
    %7 = vsyncpa [#allocation3], 0
    %s8 = scalar_lea.sflag [#allocation3], 1
    %9 = vsyncpa %s8, 0
    %10 = vsyncpa [#allocation5], 0
    loop: start=0, step=1, limit=6
    $region2: #{feature_conversion.1} parent=1 // loop_pre_header
      _
    $region3: #{feature_conversion.1} parent=1 // loop_header
      %s12 = sphi 0, %s16
      %p13 = scmp.ge.s32.totalorder %s12, 6
      %s19 = sphi 0, %s38
      %s20 = sphi 0, %s34
      %s21 = sphi 0, %s30
      %s22 = sphi 0, %s19
      %s23 = sphi 0, %s20
      %s24 = sphi 0, %s21
      %s25 = sphi 0, %s22
      %s26 = sphi 0, %s23
      %s27 = sphi 0, %s24
      %s43 = sphi 0, %s45
      %s46 = sphi 0, %s43
      %s47 = sphi 0, %s46
      %s63 = sphi 0, %s47
      %s69 = sphi 0, %s71
      %s72 = sphi 0, %s69
      %s73 = sphi 0, %s72
      %s89 = sphi 0, %s73
      %s99 = sphi 0, %s101
      %s102 = sphi 0, %s99
      %s103 = sphi 0, %s102
      %s119 = sphi 0, %s103
    $region4: #{feature_conversion.1} parent=1 // loop_header_branch
      %15 = sbr.rel (%p13) target = $region8
    $region5: #{feature_conversion.1} parent=1 // loop_body
      %s17 = ssub.s32 %s12, 1
      %s18 = ssub.s32 %s12, 2
      %s28 = sadd.s32 1, %s21
      %p29 = scmp.ge.s32.totalorder %s28, 1
      %s30 = scalar_select %p29, 0, %s28
      %s31 = sadd.s32 1, %s20
      %s32 = scalar_select %p29, %s31, %s20
      %p33 = scmp.ge.s32.totalorder %s32, 2
      %s34 = scalar_select %p33, 0, %s32
      %s35 = sadd.s32 1, %s19
      %s36 = scalar_select %p33, %s35, %s19
      %p37 = scmp.ge.s32.totalorder %s36, 2
      %s38 = scalar_select %p37, 0, %s36
      %s39 = ssub.s32 %s19, %s38
      %s40 = ssub.s32 %s20, %s34
      %s41 = sor.u32 %s39, %s40
      %p42 = scmp.eq.s32.totalorder %s41, 0
      %s44 = sadd.s32 %s43, 1
      %s45 = scalar_select %p42, %s43, %s44
      %p48 = pneg %p42
      %p49 = scmp.eq.s32.totalorder %s12, 3
      %p50 = por %p48, %p49
      %p51 = scmp.ne.s32.totalorder %s43, %s46
      %p52 = scmp.eq.s32.totalorder %s12, 0
      %p53 = por %p51, %p52
      %p54 = scmp.ne.s32.totalorder %s43, %s46
      %p55 = scmp.eq.s32.totalorder %s17, 3
      %p56 = por %p54, %p55
      %p57 = scmp.ne.s32.totalorder %s46, %s47
      %p58 = scmp.eq.s32.totalorder %s17, 0
      %p59 = por %p57, %p58
      %p60 = scmp.ne.s32.totalorder %s46, %s47
      %p61 = scmp.eq.s32.totalorder %s18, 3
      %p62 = por %p60, %p61
      %p64 = scmp.ne.s32.totalorder %s47, %s63
      %p65 = scmp.eq.s32.totalorder %s18, 0
      %p66 = por %p64, %p65
      %s67 = ssub.s32 %s21, %s30
      %p68 = scmp.eq.s32.totalorder %s67, 0
      %s70 = sadd.s32 %s69, 1
      %s71 = scalar_select %p68, %s69, %s70
      %p74 = pneg %p68
      %p75 = scmp.eq.s32.totalorder %s12, 3
      %p76 = por %p74, %p75
      %p77 = scmp.ne.s32.totalorder %s69, %s72
      %p78 = scmp.eq.s32.totalorder %s12, 0
      %p79 = por %p77, %p78
      %p80 = scmp.ne.s32.totalorder %s69, %s72
      %p81 = scmp.eq.s32.totalorder %s17, 3
      %p82 = por %p80, %p81
      %p83 = scmp.ne.s32.totalorder %s72, %s73
      %p84 = scmp.eq.s32.totalorder %s17, 0
      %p85 = por %p83, %p84
      %p86 = scmp.ne.s32.totalorder %s72, %s73
      %p87 = scmp.eq.s32.totalorder %s18, 3
      %p88 = por %p86, %p87
      %p90 = scmp.ne.s32.totalorder %s73, %s89
      %p91 = scmp.eq.s32.totalorder %s18, 0
      %p92 = por %p90, %p91
      %s93 = ssub.s32 %s19, %s38
      %s94 = ssub.s32 %s20, %s34
      %s95 = sor.u32 %s93, %s94
      %s96 = ssub.s32 %s21, %s30
      %s97 = sor.u32 %s95, %s96
      %p98 = scmp.eq.s32.totalorder %s97, 0
      %s100 = sadd.s32 %s99, 1
      %s101 = scalar_select %p98, %s99, %s100
      %p104 = pneg %p98
      %p105 = scmp.eq.s32.totalorder %s12, 3
      %p106 = por %p104, %p105
      %p107 = scmp.ne.s32.totalorder %s99, %s102
      %p108 = scmp.eq.s32.totalorder %s12, 0
      %p109 = por %p107, %p108
      %p110 = scmp.ne.s32.totalorder %s99, %s102
      %p111 = scmp.eq.s32.totalorder %s17, 3
      %p112 = por %p110, %p111
      %p113 = scmp.ne.s32.totalorder %s102, %s103
      %p114 = scmp.eq.s32.totalorder %s17, 0
      %p115 = por %p113, %p114
      %p116 = scmp.ne.s32.totalorder %s102, %s103
      %p117 = scmp.eq.s32.totalorder %s18, 3
      %p118 = por %p116, %p117
      %p120 = scmp.ne.s32.totalorder %s103, %s119
      %p121 = scmp.eq.s32.totalorder %s18, 0
      %p122 = por %p120, %p121
      %p123 = scmp.le.s32.totalorder 1, %s12
      %p124 = scmp.lt.s32.totalorder %s12, 5
      %p125 = pnand %p123, %p124
      %p126 = pneg %p125
      // Predicated region
      $region9: #{feature_conversion.1} parent=5 // pred_check
        _
      $region10: #{feature_conversion.1} parent=5 // pred_check_branch
        %128 = sbr.rel (%p125) target = $region12
      $region11: #{feature_conversion.1} parent=5 // pred_region
        %s129 = ssub.s32 %s12, 1
        // Predicated region
        $region13: #{feature_conversion.1} parent=11 // pred_check
          %p130 = pneg %p85
        $region14: #{feature_conversion.1} parent=11 // pred_check_branch
          %132 = sbr.rel (%p130) target = $region16
        $region15: #{feature_conversion.1} parent=11 // pred_region
          %134 = vsyncadd [#allocation5], 0
          %s135 = smul.addr %s24, 8
          %s136 = scalar_lea.hbm %s1, %s135
          %s137 = sshll.u32 %s136, 4
          %s138 = int_to_ptr.hbm [resolvable:$true] %s137
          %s139 = sshll.u32 [#allocation4], 4
          %s140 = int_to_ptr.vmem [resolvable:$true] %s139
          %145 = dma.hbm_to_vmem [thread:$0]  %s138, 512, %s140, [#allocation5], 128, 128, 8
        $region16: #{feature_conversion.1} parent=11 // pred_fallthru
          _
      $region12: #{feature_conversion.1} parent=5 // pred_fallthru
        _
      %p146 = scmp.lt.s32.totalorder %s12, 4
      // Predicated region
      $region17: #{feature_conversion.1} parent=5 // pred_check
        %p147 = pneg %p146
      $region18: #{feature_conversion.1} parent=5 // pred_check_branch
        %149 = sbr.rel (%p147) target = $region20
      $region19: #{feature_conversion.1} parent=5 // pred_region
        // Predicated region
        $region21: #{feature_conversion.1} parent=19 // pred_check
          %p150 = pneg %p53
        $region22: #{feature_conversion.1} parent=19 // pred_check_branch
          %152 = sbr.rel (%p150) target = $region24
        $region23: #{feature_conversion.1} parent=19 // pred_region
          %s153 = sand.u32 %s43, 1
          %s154 = scalar_lea.sflag [#allocation3], %s153
          %s155 = sand.u32 %s43, 1
          %s156 = smul.addr %s155, 32
          %s157 = scalar_lea.vmem [#allocation2], %s156
          %s158 = smul.u32 4, %s20
          %160 = vsyncadd %s154, 0
          %s161 = smul.addr %s19, 8
          %s162 = sadd.s32 %s158, %s161
          %s163 = smul.addr %s162, 8
          %s164 = scalar_lea.hbm %s0, %s163
          %s165 = sshll.u32 %s164, 4
          %s166 = int_to_ptr.hbm [resolvable:$true] %s165
          %s167 = sshll.u32 %s157, 4
          %s168 = int_to_ptr.vmem [resolvable:$true] %s167
          %173 = dma.hbm_to_vmem [thread:$0]  %s166, 512, %s168, %s154, 128, 128, 8
        $region24: #{feature_conversion.1} parent=19 // pred_fallthru
          _
      $region20: #{feature_conversion.1} parent=5 // pred_fallthru
        _
      %p174 = scmp.le.s32.totalorder 1, %s12
      %p175 = scmp.lt.s32.totalorder %s12, 5
      %p176 = pnand %p174, %p175
      %p177 = pneg %p176
      // Predicated region
      $region25: #{feature_conversion.1} parent=5 // pred_check
        _
      $region26: #{feature_conversion.1} parent=5 // pred_check_branch
        %179 = sbr.rel (%p176) target = $region28
      $region27: #{feature_conversion.1} parent=5 // pred_region
        %s180 = ssub.s32 %s12, 1
        %s181 = sand.u32 %s46, 1
        %s182 = scalar_lea.sflag [#allocation3], %s181
        %s183 = sand.u32 %s46, 1
        %s184 = smul.addr %s183, 32
        %s185 = scalar_lea.vmem [#allocation2], %s184
        // Predicated region
        $region29: #{feature_conversion.1} parent=27 // pred_check
          %p186 = pneg %p59
        $region30: #{feature_conversion.1} parent=27 // pred_check_branch
          %188 = sbr.rel (%p186) target = $region32
        $region31: #{feature_conversion.1} parent=27 // pred_region
          %190 = dma.done %s182, 512
        $region32: #{feature_conversion.1} parent=27 // pred_fallthru
          _
        // Predicated region
        $region33: #{feature_conversion.1} parent=27 // pred_check
          %p191 = pneg %p85
        $region34: #{feature_conversion.1} parent=27 // pred_check_branch
          %193 = sbr.rel (%p191) target = $region36
        $region35: #{feature_conversion.1} parent=27 // pred_region
          %195 = dma.done [#allocation5], 512
        $region36: #{feature_conversion.1} parent=27 // pred_fallthru
          _
        %s196 = sand.u32 %s46, 1
        %s197 = scalar_lea.sflag [#allocation3], %s196
        %s198 = sand.u32 %s46, 1
        %s199 = smul.addr %s198, 32
        %s200 = scalar_lea.vmem [#allocation2], %s199
        %p201 = pneg %p59
        %p202 = pneg %p56
        %p203 = pneg %p85
        %p204 = pneg %p82
        %p205 = pneg %p115
        %p206 = pneg %p112
        %s207 = sand.u32 %s102, 1
        %s208 = sand.u32 %s102, 1
        %s209 = smul.addr %s208, 64
        %s210 = scalar_lea.vmem [#allocation6], %s209
        %s211 = smul.u32 4, %s23
        %s212 = smul.u32 4, %s23
        %v213 = vld [vmem:[%s185] sm:$0xff]
        %v214 = vld [vmem:[%s185 + $0x8] sm:$0xff]
        %v215 = vld [vmem:[%s185 + $0x10] sm:$0xff]
        %v216 = vld [vmem:[%s185 + $0x18] sm:$0xff]
        %v217 = vld [vmem:[#allocation4] sm:$0xff]
        %v218 = vld [vmem:[#allocation4 + $0x8] sm:$0xff]
        %s219 = scalar_lea.vmem [#allocation4], 16
        %v220 = vld [vmem:[%s219] sm:$0xff]
        %v221 = vld [vmem:[%s219 + $0x8] sm:$0xff]
        %vm222 = vcmask 130048
        %v224 = vsel %vm222, %v213, 0
        %v227 = vsel %vm222, %v214, 0
        %v230 = vsel %vm222, %v215, 0
        %v233 = vsel %vm222, %v216, 0
        %235 = vmatpush.msra.mxu0 0.0
        %236 = vmatpush.msra.mxu0 0.0
        %237 = vmatpush.msra.mxu0 0.0
        %238 = vmatpush.msra.mxu0 0.0
        %239 = vmatpush.msra.mxu0 0.0
        %240 = vmatpush.msra.mxu0 0.0
        %241 = vmatpush.msra.mxu0 0.0
        %242 = vmatpush.msra.mxu0 0.0
        %243 = vmatpush.msra.mxu0 0.0
        %244 = vmatpush.msra.mxu0 0.0
        %245 = vmatpush.msra.mxu0 0.0
        %246 = vmatpush.msra.mxu0 0.0
        %247 = vmatpush.msra.mxu0 0.0
        %248 = vmatpush.msra.mxu0 0.0
        %249 = vmatpush.msra.mxu0 %v218
        %250 = vmatpush.msra.mxu0 %v217
        %251 = vmatmul.f32.gmra.mxu0 %v224
        %v252 = vpop.f32.mrf.mxu0
        %v253 = vadd.f32 0.0, %v252
        %254 = vmatmul.f32.gmra.mxu0 %v227
        %v255 = vpop.f32.mrf.mxu0
        %v256 = vadd.f32 0.0, %v255
        %257 = vmatmul.f32.gmra.mxu0 %v230
        %v258 = vpop.f32.mrf.mxu0
        %v259 = vadd.f32 0.0, %v258
        %260 = vmatmul.f32.gmra.mxu0 %v233
        %v261 = vpop.f32.mrf.mxu0
        %v262 = vadd.f32 0.0, %v261
        %263 = vdwg.mxu0
        %vm264 = vcmask 72704
        %265 = vst.msk [vmem:[%s210] sm:$0xff] %vm264, %v253
        %266 = vst.msk [vmem:[%s210 + $0x8] sm:$0xff] %vm264, %v256
        %267 = vst.msk [vmem:[%s210 + $0x10] sm:$0xff] %vm264, %v259
        %268 = vst.msk [vmem:[%s210 + $0x18] sm:$0xff] %vm264, %v262
        %269 = vmatpush.msra.mxu0 0.0
        %270 = vmatpush.msra.mxu0 0.0
        %271 = vmatpush.msra.mxu0 0.0
        %272 = vmatpush.msra.mxu0 0.0
        %273 = vmatpush.msra.mxu0 0.0
        %274 = vmatpush.msra.mxu0 0.0
        %275 = vmatpush.msra.mxu0 0.0
        %276 = vmatpush.msra.mxu0 0.0
        %277 = vmatpush.msra.mxu0 0.0
        %278 = vmatpush.msra.mxu0 0.0
        %279 = vmatpush.msra.mxu0 0.0
        %280 = vmatpush.msra.mxu0 0.0
        %281 = vmatpush.msra.mxu0 0.0
        %282 = vmatpush.msra.mxu0 0.0
        %283 = vmatpush.msra.mxu0 %v221
        %284 = vmatpush.msra.mxu0 %v220
        %285 = vmatmul.f32.gmra.mxu0 %v224
        %v286 = vpop.f32.mrf.mxu0
        %v287 = vadd.f32 0.0, %v286
        %288 = vmatmul.f32.gmra.mxu0 %v227
        %v289 = vpop.f32.mrf.mxu0
        %v290 = vadd.f32 0.0, %v289
        %291 = vmatmul.f32.gmra.mxu0 %v230
        %v292 = vpop.f32.mrf.mxu0
        %v293 = vadd.f32 0.0, %v292
        %294 = vmatmul.f32.gmra.mxu0 %v233
        %v295 = vpop.f32.mrf.mxu0
        %v296 = vadd.f32 0.0, %v295
        %297 = vdwg.mxu0
        %s298 = scalar_lea.vmem %s210, 32 [#allocation6]
        %299 = vst.msk [vmem:[%s298] sm:$0xff] %vm264, %v287
        %300 = vst.msk [vmem:[%s298 + $0x8] sm:$0xff] %vm264, %v290
        %301 = vst.msk [vmem:[%s298 + $0x10] sm:$0xff] %vm264, %v293
        %302 = vst.msk [vmem:[%s298 + $0x18] sm:$0xff] %vm264, %v296
        %s303 = sand.u32 %s102, 1
        %s304 = sand.u32 %s102, 1
        %s305 = smul.addr %s304, 64
        %s306 = scalar_lea.vmem [#allocation6], %s305
        // Predicated region
        $region37: #{feature_conversion.1} parent=27 // pred_check
          %p307 = pneg %p112
        $region38: #{feature_conversion.1} parent=27 // pred_check_branch
          %309 = sbr.rel (%p307) target = $region40
        $region39: #{feature_conversion.1} parent=27 // pred_region
          %s310 = smul.u32 4, %s23
          %s311 = sadd.s32 %s24, %s310
          %s312 = smul.addr %s22, 16
          %s313 = sadd.s32 %s311, %s312
          %s314 = smul.addr %s313, 8
          %s315 = scalar_lea.vmem %s2, %s314
          // Predicated region
          $region41: #{feature_conversion.1} parent=39 // pred_check
            _
          $region42: #{feature_conversion.1} parent=39 // pred_check_branch
            %317 = sbr.rel (0) target = $region44
          $region43: #{feature_conversion.1} parent=39 // pred_region
            // Predicated region
            $region45: #{feature_conversion.1} parent=43 // pred_check
              _
            $region46: #{feature_conversion.1} parent=43 // pred_check_branch
              %319 = sbr.rel (0) target = $region48
            $region47: #{feature_conversion.1} parent=43 // pred_region
              // Predicated region
              $region60: #{feature_conversion.1} parent=47 // pred_check
                _
              $region61: #{feature_conversion.1} parent=47 // pred_check_branch
                %349 = sbr.rel (0) target = $region63
              $region62: #{feature_conversion.1} parent=47 // pred_region
                loop: start=0, step=1, limit=1
                $region64: #{feature_conversion.1} parent=62 // loop_pre_header
                  _
                $region65: #{feature_conversion.1} parent=62 // loop_header
                  %s351 = sphi 0, %s355
                  %p352 = scmp.ge.s32.totalorder %s351, 1
                  %s356 = sphi %s306, %s306
                  %s357 = sphi %s315, %s315
                $region66: #{feature_conversion.1} parent=62 // loop_header_branch
                  %354 = sbr.rel (%p352) target = $region70
                $region67: #{feature_conversion.1} parent=62 // loop_body
                  %v358 = vld [vmem:[%s356] sm:$0xff]
                  %359 = vst [vmem:[%s357] sm:$0xff] %v358
                  %v360 = vld [vmem:[%s356 + $0x8] sm:$0xff]
                  %361 = vst [vmem:[%s357 + $0x8] sm:$0xff] %v360
                  %v362 = vld [vmem:[%s356 + $0x10] sm:$0xff]
                  %363 = vst [vmem:[%s357 + $0x10] sm:$0xff] %v362
                  %v364 = vld [vmem:[%s356 + $0x18] sm:$0xff]
                  %365 = vst [vmem:[%s357 + $0x18] sm:$0xff] %v364
                  %v366 = vld [vmem:[%s356 + $0x20] sm:$0xff]
                  %367 = vst [vmem:[%s357 + $0x40] sm:$0xff] %v366
                  %v368 = vld [vmem:[%s356 + $0x28] sm:$0xff]
                  %369 = vst [vmem:[%s357 + $0x48] sm:$0xff] %v368
                  %v370 = vld [vmem:[%s356 + $0x30] sm:$0xff]
                  %371 = vst [vmem:[%s357 + $0x50] sm:$0xff] %v370
                  %v372 = vld [vmem:[%s356 + $0x38] sm:$0xff]
                  %373 = vst [vmem:[%s357 + $0x58] sm:$0xff] %v372
                $region68: #{feature_conversion.1} parent=62 // loop_footer
                  %s355 = sadd.s32 1, %s351
                $region69: #{feature_conversion.1} parent=62 // loop_footer_branch
                  %350 = sbr.rel target = $region65
                $region70: #{feature_conversion.1} parent=62 // loop_exit
                  _
              $region63: #{feature_conversion.1} parent=47 // pred_fallthru
                _
              // Predicated region
              $region71: #{feature_conversion.1} parent=47 // pred_check
                _
              $region72: #{feature_conversion.1} parent=47 // pred_check_branch
                %375 = sbr.rel target = $region74
              $region73: #{feature_conversion.1} parent=47 // pred_region
                _
              $region74: #{feature_conversion.1} parent=47 // pred_fallthru
                _
            $region48: #{feature_conversion.1} parent=43 // pred_fallthru
              _
            // Predicated region
            $region49: #{feature_conversion.1} parent=43 // pred_check
              _
            $region50: #{feature_conversion.1} parent=43 // pred_check_branch
              %321 = sbr.rel target = $region52
            $region51: #{feature_conversion.1} parent=43 // pred_region
              %s323 = ssub.s32 256, 1
              loop: start=0, step=1, limit=1
              $region53: #{feature_conversion.1} parent=51 // loop_pre_header
                _
              $region54: #{feature_conversion.1} parent=51 // loop_header
                %s325 = sphi 0, %s329
                %p326 = scmp.ge.s32.totalorder %s325, 1
                %s330 = sphi %s306, %s306
                %s331 = sphi %s315, %s315
              $region55: #{feature_conversion.1} parent=51 // loop_header_branch
                %328 = sbr.rel (%p326) target = $region59
              $region56: #{feature_conversion.1} parent=51 // loop_body
                %v332 = vld [vmem:[%s330] sm:%s323]
                %333 = vst [vmem:[%s331] sm:%s323] %v332
                %v334 = vld [vmem:[%s330 + $0x8] sm:%s323]
                %335 = vst [vmem:[%s331 + $0x8] sm:%s323] %v334
                %v336 = vld [vmem:[%s330 + $0x10] sm:%s323]
                %337 = vst [vmem:[%s331 + $0x10] sm:%s323] %v336
                %v338 = vld [vmem:[%s330 + $0x18] sm:%s323]
                %339 = vst [vmem:[%s331 + $0x18] sm:%s323] %v338
                %v340 = vld [vmem:[%s330 + $0x20] sm:%s323]
                %341 = vst [vmem:[%s331 + $0x40] sm:%s323] %v340
                %v342 = vld [vmem:[%s330 + $0x28] sm:%s323]
                %343 = vst [vmem:[%s331 + $0x48] sm:%s323] %v342
                %v344 = vld [vmem:[%s330 + $0x30] sm:%s323]
                %345 = vst [vmem:[%s331 + $0x50] sm:%s323] %v344
                %v346 = vld [vmem:[%s330 + $0x38] sm:%s323]
                %347 = vst [vmem:[%s331 + $0x58] sm:%s323] %v346
              $region57: #{feature_conversion.1} parent=51 // loop_footer
                %s329 = sadd.s32 1, %s325
              $region58: #{feature_conversion.1} parent=51 // loop_footer_branch
                %324 = sbr.rel target = $region54
              $region59: #{feature_conversion.1} parent=51 // loop_exit
                _
            $region52: #{feature_conversion.1} parent=43 // pred_fallthru
              _
          $region44: #{feature_conversion.1} parent=39 // pred_fallthru
            _
          %376 = vnop
        $region40: #{feature_conversion.1} parent=27 // pred_fallthru
          _
      $region28: #{feature_conversion.1} parent=5 // pred_fallthru
        _
      %p377 = scmp.le.s32.totalorder 2, %s12
      // Predicated region
      $region75: #{feature_conversion.1} parent=5 // pred_check
        %p378 = pneg %p377
      $region76: #{feature_conversion.1} parent=5 // pred_check_branch
        %380 = sbr.rel (%p378) target = $region78
      $region77: #{feature_conversion.1} parent=5 // pred_region
        %s381 = ssub.s32 %s12, 2
        // Predicated region
        $region79: #{feature_conversion.1} parent=77 // pred_check
          %p382 = pneg %p118
        $region80: #{feature_conversion.1} parent=77 // pred_check_branch
          %384 = sbr.rel (%p382) target = $region82
        $region81: #{feature_conversion.1} parent=77 // pred_region
          %s385 = sand.u32 %s103, 1
          %s386 = sand.u32 %s103, 1
          %s387 = smul.addr %s386, 64
          %s388 = scalar_lea.vmem [#allocation6], %s387
        $region82: #{feature_conversion.1} parent=77 // pred_fallthru
          _
      $region78: #{feature_conversion.1} parent=5 // pred_fallthru
        _
    $region6: #{feature_conversion.1} parent=1 // loop_footer
      %s16 = sadd.s32 1, %s12
    $region7: #{feature_conversion.1} parent=1 // loop_footer_branch
      %11 = sbr.rel target = $region3
    $region8: #{feature_conversion.1} parent=1 // loop_exit
      _
    %389 = vsyncpa [#allocation3], 1
    %s390 = scalar_lea.sflag [#allocation3], 1
    %391 = vsyncpa %s390, 1
    %392 = vsyncpa [#allocation5], 1

</llo_original>
